<compile_context>
chip_gen: v7x
topology: tpu7x:2x2x1
jax: 0.10.0
libtpu: 0.0.40
codegen_flags: <defaults>
</compile_context>

<pallas_src>
import functools

import jax
import jax.numpy as jnp
from jax.experimental import pallas as pl
from jax.experimental.pallas import tpu as pltpu


def pam_kernel(x_ref, xp_ref, wqg_ref, bqg_ref, wk_ref, bk_ref, o_ref, *,
               key_dim, np_valid):
    x = x_ref[0]          # (C, TN)      f32 channel-major tile of the image
    xp = xp_ref[0]        # (C, Np_pad)  f32 pooled features (resident block)

    # Fused Q + gamma projection: rows 0..Kd-1 are Q, row Kd is the gate logit.
    qg = jnp.dot(wqg_ref[...], x,
                 preferred_element_type=jnp.float32) + bqg_ref[...]   # (Kd+1, TN)
    q = qg[:key_dim, :]                                               # (Kd, TN)
    g = jax.nn.sigmoid(qg[key_dim:key_dim + 1, :])                    # (1, TN)

    # K projection on the pooled features (tiny; recomputed per tile).
    k = jnp.dot(wk_ref[...], xp,
                preferred_element_type=jnp.float32) + bk_ref[...]     # (Kd, Np_pad)
    k_t = k.T                                                         # (Np_pad, Kd)

    # energy_t[p, n] = <k_p, q_n>  — query positions stay on the lane axis so
    # this and the value matmul are standard MXU matmuls. bf16 in / f32 acc.
    energy = jnp.dot(k_t.astype(jnp.bfloat16), q.astype(jnp.bfloat16),
                     preferred_element_type=jnp.float32)              # (Np_pad, TN)

    # Mask zero-padded key positions before the softmax.
    if np_valid != energy.shape[0]:
        row = jax.lax.broadcasted_iota(jnp.int32, energy.shape, 0)
        energy = jnp.where(row < np_valid, energy, -jnp.inf)

    # Numerically-stable softmax over key positions (sublane axis), f32.
    m = jnp.max(energy, axis=0, keepdims=True)
    e = jnp.exp(energy - m)
    attn = e * pl.reciprocal(jnp.sum(e, axis=0, keepdims=True), approx=True)

    # out[c, n] = sum_p xp[c, p] * attn[p, n]
    out = jnp.dot(xp.astype(jnp.bfloat16), attn.astype(jnp.bfloat16),
                  preferred_element_type=jnp.float32)                 # (C, TN)

    # Residual gate in f32: (1 - gamma) * attention_out + gamma * x.
    o_ref[0] = ((1.0 - g) * out + g * x).astype(o_ref.dtype)


def _choose_tile_n(n, np_pad, c, bytes_budget=8 * 1024 * 1024):
    """Largest 128-multiple tile of the query axis that divides n and keeps the
    per-step VMEM working set (energy/exp/attn tiles + bf16 copies + the
    double-buffered x/out blocks) inside `bytes_budget` — safe on v7x's 64 MiB
    VMEM and comfortably under the explicit vmem limit on v5e/v6e."""
    if n % 128 != 0:
        return n  # fall back to a full block (must equal the array dim)

    def step_bytes(t):
        return t * (4 * np_pad * 4 + 4 * c * 4)

    tn = 128
    while n % (tn * 2) == 0 and step_bytes(tn * 2) <= bytes_budget:
        tn *= 2
    return tn


@jax.jit
def pam_forward(x, wq, bq, wk, bk, wg, bg):
    """x: (B, C, H, W) NCHW; 1x1-conv weights as (in, out) matrices, biases (out,).

    Returns (B, C, H, W), matching PAM_Module.forward.
    """
    B, C, H, W = x.shape
    Kd = wq.shape[1]
    hp, wp = H // 2, W // 2
    N, Np = H * W, hp * wp
    Np_pad = ((Np + 127) // 128) * 128

    # MaxPool2d(kernel_size=2), floor mode: crop odd trailing row/col, then
    # reshape + max (exact match to torch's default pooling).
    xp = x[:, :, :hp * 2, :wp * 2].reshape(B, C, hp, 2, wp, 2).max(axis=(3, 5))

    # Channel-major flattening — pure reshapes, no transposes, no extra HBM pass.
    x_cm = x.reshape(B, C, N)
    xp_cm = xp.reshape(B, C, Np)
    if Np_pad != Np:
        xp_cm = jnp.pad(xp_cm, ((0, 0), (0, 0), (0, Np_pad - Np)))

    # Fuse the gamma 1x1 conv into the Q projection (extra output row) and
    # pre-transpose the tiny weights so every in-kernel matmul is standard.
    wqg_t = jnp.concatenate([wq, wg], axis=1).T                  # (Kd+1, C)
    bqg = jnp.concatenate([bq, bg], axis=0).reshape(Kd + 1, 1)   # (Kd+1, 1)
    wk_t = wk.T                                                  # (Kd, C)
    bk_c = bk.reshape(Kd, 1)                                     # (Kd, 1)

    TN = _choose_tile_n(N, Np_pad, C)
    grid = (B, N // TN)

    grid_spec = pltpu.PrefetchScalarGridSpec(
        num_scalar_prefetch=0,
        grid=grid,
        in_specs=[
            pl.BlockSpec((1, C, TN), lambda b, n: (b, 0, n)),       # x tile
            pl.BlockSpec((1, C, Np_pad), lambda b, n: (b, 0, 0)),   # pooled x (resident)
            pl.BlockSpec((Kd + 1, C), lambda b, n: (0, 0)),         # fused Wq|Wg
            pl.BlockSpec((Kd + 1, 1), lambda b, n: (0, 0)),         # fused bq|bg
            pl.BlockSpec((Kd, C), lambda b, n: (0, 0)),             # Wk
            pl.BlockSpec((Kd, 1), lambda b, n: (0, 0)),             # bk
        ],
        out_specs=pl.BlockSpec((1, C, TN), lambda b, n: (b, 0, n)),
    )

    kernel = functools.partial(pam_kernel, key_dim=Kd, np_valid=Np)
    out_cm = pl.pallas_call(
        kernel,
        out_shape=jax.ShapeDtypeStruct((B, C, N), x.dtype),
        grid_spec=grid_spec,
        compiler_params=pltpu.CompilerParams(
            dimension_semantics=("parallel", "parallel"),
            vmem_limit_bytes=48 * 1024 * 1024),
    )(x_cm, xp_cm, wqg_t, bqg, wk_t, bk_c)

    return out_cm.reshape(B, C, H, W)


def pam_reference(x, wq, bq, wk, bk, wg, bg):
    """Pure-JAX transcription of the torch forward, for verification (all f32)."""
    B, C, H, W = x.shape
    hp, wp = H // 2, W // 2
    xp = x[:, :, :hp * 2, :wp * 2].reshape(B, C, hp, 2, wp, 2).max(axis=(3, 5))
    q = jnp.einsum('bchw,ck->bkhw', x, wq) + bq.reshape(1, -1, 1, 1)
    k = jnp.einsum('bchw,ck->bkhw', xp, wk) + bk.reshape(1, -1, 1, 1)
    pq = q.reshape(B, -1, H * W).transpose(0, 2, 1)         # (B, N, Kd)
    pk = k.reshape(B, -1, hp * wp)                           # (B, Kd, Np)
    energy = jnp.einsum('bnk,bkp->bnp', pq, pk)              # (B, N, Np)
    attn = jax.nn.softmax(energy, axis=-1)
    pv = xp.reshape(B, C, hp * wp)                           # (B, C, Np)
    out = jnp.einsum('bcp,bnp->bcn', pv, attn).reshape(B, C, H, W)
    g = jax.nn.sigmoid(jnp.einsum('bchw,co->bohw', x, wg) + bg.reshape(1, 1, 1, 1))
    return (1.0 - g) * out + g * x


if __name__ == "__main__":
    B, C, H, W = 2, 4, 16, 16
    key_dim = 8   # in_dim=4, key_dim=8 (value_dim/out_dim unused by the forward)

    key = jax.random.PRNGKey(0)
    k0, k1, k2, k3, k4, k5, k6 = jax.random.split(key, 7)

    x = jax.random.normal(k0, (B, C, H, W), dtype=jnp.float32)

    # Deterministic synthetic parameters (1x1-conv weights as (in, out) mats).
    wq = jax.random.normal(k1, (C, key_dim), dtype=jnp.float32) * 0.2
    bq = jax.random.normal(k2, (key_dim,), dtype=jnp.float32) * 0.1
    wk = jax.random.normal(k3, (C, key_dim), dtype=jnp.float32) * 0.2
    bk = jax.random.normal(k4, (key_dim,), dtype=jnp.float32) * 0.1
    wg = jax.random.normal(k5, (C, 1), dtype=jnp.float32) * 0.2
    bg = jax.random.normal(k6, (1,), dtype=jnp.float32) * 0.1

    out = jax.block_until_ready(pam_forward(x, wq, bq, wk, bk, wg, bg))
    ref = pam_reference(x, wq, bq, wk, bk, wg, bg)

    assert out.shape == (B, C, H, W)
    # Tolerance loosened vs a pure-f32 kernel: the energy and value matmuls run
    # with bf16 MXU inputs (f32 accumulation) + approx reciprocal in softmax.
    max_err = float(jnp.max(jnp.abs(out - ref)))
    assert max_err < 3e-2, f"mismatch vs reference: max abs err {max_err}"

    print("KERNEL_OK")
</pallas_src>

<mosaic_0001>
module attributes {stable_mosaic.version = 11 : i64} {
  func.func @pam_kernel(%arg0: i32, %arg1: i32, %arg2: memref<1x4x256xf32, #tpu.memory_space<vmem>>, %arg3: memref<1x4x128xf32, #tpu.memory_space<vmem>>, %arg4: memref<9x4xf32, #tpu.memory_space<vmem>>, %arg5: memref<9x1xf32, #tpu.memory_space<vmem>>, %arg6: memref<8x4xf32, #tpu.memory_space<vmem>>, %arg7: memref<8x1xf32, #tpu.memory_space<vmem>>, %arg8: memref<1x4x256xf32, #tpu.memory_space<vmem>>) attributes {dimension_semantics = [#tpu.dimension_semantics<parallel>, #tpu.dimension_semantics<parallel>], iteration_bounds = array<i64: 2, 1>, scalar_prefetch = 0 : i64, scratch_operands = 0 : i64, tpu.core_type = #tpu.core_type<tc>, window_params = [{transform_indices = @transform_0, window_bounds = array<i64: 1, 4, 256>}, {transform_indices = @transform_1, window_bounds = array<i64: 1, 4, 128>}, {pipeline_mode = #tpu.pipeline_mode<synchronous>, transform_indices = @transform_2, window_bounds = array<i64: 9, 4>}, {pipeline_mode = #tpu.pipeline_mode<synchronous>, transform_indices = @transform_3, window_bounds = array<i64: 9, 1>}, {pipeline_mode = #tpu.pipeline_mode<synchronous>, transform_indices = @transform_4, window_bounds = array<i64: 8, 4>}, {pipeline_mode = #tpu.pipeline_mode<synchronous>, transform_indices = @transform_5, window_bounds = array<i64: 8, 1>}, {transform_indices = @transform_6, window_bounds = array<i64: 1, 4, 256>}]} {
    %c0 = arith.constant 0 : index
    %c0_0 = arith.constant 0 : index
    %c0_1 = arith.constant 0 : index
    %0 = vector.load %arg2[%c0, %c0_0, %c0_1] : memref<1x4x256xf32, #tpu.memory_space<vmem>>, vector<1x4x256xf32>
    %1 = vector.shape_cast %0 : vector<1x4x256xf32> to vector<4x256xf32>
    %c0_2 = arith.constant 0 : index
    %c0_3 = arith.constant 0 : index
    %c0_4 = arith.constant 0 : index
    %2 = vector.load %arg3[%c0_2, %c0_3, %c0_4] : memref<1x4x128xf32, #tpu.memory_space<vmem>>, vector<1x4x128xf32>
    %3 = vector.shape_cast %2 : vector<1x4x128xf32> to vector<4x128xf32>
    %c0_5 = arith.constant 0 : index
    %c0_6 = arith.constant 0 : index
    %4 = vector.load %arg4[%c0_5, %c0_6] : memref<9x4xf32, #tpu.memory_space<vmem>>, vector<9x4xf32>
    %cst = arith.constant dense<0.000000e+00> : vector<9x256xf32>
    %5 = tpu.matmul %4, %1, %cst {dimension_numbers = #tpu.dot_dimension_numbers<[1], [0], [0], [1], [0, 0, 1, 1], [], []>} : vector<9x4xf32>, vector<4x256xf32>, vector<9x256xf32> -> vector<9x256xf32>
    %c0_7 = arith.constant 0 : index
    %c0_8 = arith.constant 0 : index
    %6 = vector.load %arg5[%c0_7, %c0_8] : memref<9x1xf32, #tpu.memory_space<vmem>>, vector<9x1xf32>
    %7 = vector.broadcast %6 : vector<9x1xf32> to vector<9x256xf32>
    %8 = arith.addf %5, %7 : vector<9x256xf32>
    %9 = vector.extract_strided_slice %8 {offsets = [0, 0], sizes = [8, 256], strides = [1, 1]} : vector<9x256xf32> to vector<8x256xf32>
    %10 = vector.extract_strided_slice %8 {offsets = [8, 0], sizes = [1, 256], strides = [1, 1]} : vector<9x256xf32> to vector<1x256xf32>
    %11 = arith.negf %10 : vector<1x256xf32>
    %12 = math.exp %11 : vector<1x256xf32>
    %cst_9 = arith.constant 1.000000e+00 : f32
    %13 = vector.broadcast %cst_9 : f32 to vector<1x256xf32>
    %14 = arith.addf %13, %12 : vector<1x256xf32>
    %15 = arith.divf %13, %14 : vector<1x256xf32>
    %c0_10 = arith.constant 0 : index
    %c0_11 = arith.constant 0 : index
    %16 = vector.load %arg6[%c0_10, %c0_11] : memref<8x4xf32, #tpu.memory_space<vmem>>, vector<8x4xf32>
    %cst_12 = arith.constant dense<0.000000e+00> : vector<8x128xf32>
    %17 = tpu.matmul %16, %3, %cst_12 {dimension_numbers = #tpu.dot_dimension_numbers<[1], [0], [0], [1], [0, 0, 1, 1], [], []>} : vector<8x4xf32>, vector<4x128xf32>, vector<8x128xf32> -> vector<8x128xf32>
    %c0_13 = arith.constant 0 : index
    %c0_14 = arith.constant 0 : index
    %18 = vector.load %arg7[%c0_13, %c0_14] : memref<8x1xf32, #tpu.memory_space<vmem>>, vector<8x1xf32>
    %19 = vector.broadcast %18 : vector<8x1xf32> to vector<8x128xf32>
    %20 = arith.addf %17, %19 : vector<8x128xf32>
    %21 = tpu.transpose %20, [1, 0] : vector<8x128xf32> -> vector<128x8xf32>
    %22 = arith.truncf %21 : vector<128x8xf32> to vector<128x8xbf16>
    %23 = arith.truncf %9 : vector<8x256xf32> to vector<8x256xbf16>
    %cst_15 = arith.constant dense<0.000000e+00> : vector<128x256xf32>
    %24 = tpu.matmul %22, %23, %cst_15 {dimension_numbers = #tpu.dot_dimension_numbers<[1], [0], [0], [1], [0, 0, 1, 1], [], []>} : vector<128x8xbf16>, vector<8x256xbf16>, vector<128x256xf32> -> vector<128x256xf32>
    %25 = tpu.iota {dimensions = array<i32: 0>} : vector<128x256xi32>
    %c64_i32 = arith.constant 64 : i32
    %26 = vector.broadcast %c64_i32 : i32 to vector<128x256xi32>
    %27 = arith.cmpi slt, %25, %26 : vector<128x256xi32>
    %cst_16 = arith.constant 0xFF800000 : f32
    %28 = vector.broadcast %cst_16 : f32 to vector<128x256xf32>
    %29 = arith.select %27, %24, %28 : vector<128x256xi1>, vector<128x256xf32>
    %cst_17 = arith.constant dense<0xFF800000> : vector<256xf32>
    %30 = vector.multi_reduction <maximumf>, %29, %cst_17 [0] : vector<128x256xf32> to vector<256xf32>
    %31 = vector.shape_cast %30 : vector<256xf32> to vector<1x256xf32>
    %32 = vector.broadcast %31 : vector<1x256xf32> to vector<128x256xf32>
    %33 = arith.subf %29, %32 : vector<128x256xf32>
    %34 = math.exp %33 : vector<128x256xf32>
    %cst_18 = arith.constant dense<0.000000e+00> : vector<256xf32>
    %35 = vector.multi_reduction <add>, %34, %cst_18 [0] : vector<128x256xf32> to vector<256xf32>
    %36 = vector.shape_cast %35 : vector<256xf32> to vector<1x256xf32>
    %37 = tpu.reciprocal %36 {approx = true} : vector<1x256xf32> -> vector<1x256xf32>
    %38 = vector.broadcast %37 : vector<1x256xf32> to vector<128x256xf32>
    %39 = arith.mulf %34, %38 : vector<128x256xf32>
    %40 = arith.truncf %3 : vector<4x128xf32> to vector<4x128xbf16>
    %41 = arith.truncf %39 : vector<128x256xf32> to vector<128x256xbf16>
    %cst_19 = arith.constant dense<0.000000e+00> : vector<4x256xf32>
    %42 = tpu.matmul %40, %41, %cst_19 {dimension_numbers = #tpu.dot_dimension_numbers<[1], [0], [0], [1], [0, 0, 1, 1], [], []>} : vector<4x128xbf16>, vector<128x256xbf16>, vector<4x256xf32> -> vector<4x256xf32>
    %cst_20 = arith.constant 1.000000e+00 : f32
    %43 = vector.broadcast %cst_20 : f32 to vector<1x256xf32>
    %44 = arith.subf %43, %15 : vector<1x256xf32>
    %45 = vector.broadcast %44 : vector<1x256xf32> to vector<4x256xf32>
    %46 = arith.mulf %45, %42 : vector<4x256xf32>
    %47 = vector.broadcast %15 : vector<1x256xf32> to vector<4x256xf32>
    %48 = arith.mulf %47, %1 : vector<4x256xf32>
    %49 = arith.addf %46, %48 : vector<4x256xf32>
    %c0_21 = arith.constant 0 : index
    %c0_22 = arith.constant 0 : index
    %c0_23 = arith.constant 0 : index
    %50 = vector.load %arg8[%c0_21, %c0_22, %c0_23] : memref<1x4x256xf32, #tpu.memory_space<vmem>>, vector<1x4x256xf32>
    %51 = vector.shape_cast %50 : vector<1x4x256xf32> to vector<4x256xf32>
    %52 = vector.shape_cast %49 : vector<4x256xf32> to vector<1x4x256xf32>
    tpu.vector_store %arg8[%c0_21, %c0_22, %c0_23], %52 {strides = array<i32>} : memref<1x4x256xf32, #tpu.memory_space<vmem>>, vector<1x4x256xf32>,
    return
  }
  func.func @transform_0(%arg0: i32, %arg1: i32) -> (i32, i32, i32) {
    %c0_i32 = arith.constant 0 : i32
    %c0_i32_0 = arith.constant 0 : i32
    return %arg0, %c0_i32, %arg1 : i32, i32, i32
  }
  func.func @transform_1(%arg0: i32, %arg1: i32) -> (i32, i32, i32) {
    %c0_i32 = arith.constant 0 : i32
    %c0_i32_0 = arith.constant 0 : i32
    %c0_i32_1 = arith.constant 0 : i32
    return %arg0, %c0_i32, %c0_i32_0 : i32, i32, i32
  }
  func.func @transform_2(%arg0: i32, %arg1: i32) -> (i32, i32) {
    %c0_i32 = arith.constant 0 : i32
    %c0_i32_0 = arith.constant 0 : i32
    %c0_i32_1 = arith.constant 0 : i32
    return %c0_i32, %c0_i32_0 : i32, i32
  }
  func.func @transform_3(%arg0: i32, %arg1: i32) -> (i32, i32) {
    %c0_i32 = arith.constant 0 : i32
    %c0_i32_0 = arith.constant 0 : i32
    %c0_i32_1 = arith.constant 0 : i32
    return %c0_i32, %c0_i32_0 : i32, i32
  }
  func.func @transform_4(%arg0: i32, %arg1: i32) -> (i32, i32) {
    %c0_i32 = arith.constant 0 : i32
    %c0_i32_0 = arith.constant 0 : i32
    %c0_i32_1 = arith.constant 0 : i32
    return %c0_i32, %c0_i32_0 : i32, i32
  }
  func.func @transform_5(%arg0: i32, %arg1: i32) -> (i32, i32) {
    %c0_i32 = arith.constant 0 : i32
    %c0_i32_0 = arith.constant 0 : i32
    %c0_i32_1 = arith.constant 0 : i32
    return %c0_i32, %c0_i32_0 : i32, i32
  }
  func.func @transform_6(%arg0: i32, %arg1: i32) -> (i32, i32, i32) {
    %c0_i32 = arith.constant 0 : i32
    %c0_i32_0 = arith.constant 0 : i32
    return %arg0, %c0_i32, %arg1 : i32, i32, i32
  }
}

</mosaic_0001>

<llo_original>
// kernel: pam_forward.1
$region0: #{pam_forward.1}
  #allocation0 [shape = 'u32[]', space=smem, size = 0x4, offset = 0x4, fixed_abs, tag = 'smem constant byte address 0x4 - core index']
  #allocation1 [shape = 'u32[144,128]{1,0:T(1,128)}', space=vmem, size = 0x12000, scoped, tag = 'internal scratch']
  %s0 = inlined_call_operand.vmem [shape: f32[2,4,256], index: 0, kind: input, shape index: {}]
  %s1 = inlined_call_operand.vmem [shape: f32[2,4,128], index: 1, kind: input, shape index: {}]
  %s2 = inlined_call_operand.vmem [shape: f32[9,4], index: 2, kind: input, shape index: {}]
  %s3 = inlined_call_operand.vmem [shape: f32[9,1], index: 3, kind: input, shape index: {}]
  %s4 = inlined_call_operand.vmem [shape: f32[8,4], index: 4, kind: input, shape index: {}]
  %s5 = inlined_call_operand.vmem [shape: f32[8,1], index: 5, kind: input, shape index: {}]
  %s6 = inlined_call_operand.vmem [shape: f32[2,4,256], index: 6, kind: output, shape index: {}]
  %s7 = sld [smem:[#allocation0]]
  $region57: #{pam_forward.1} parent=0
    _
  %s9 = ssub.s32 1, %s7
  %s10 = scalar_select 0, %s9, %s7
  loop: start=0, step=1, limit=4
  $region2: #{pam_forward.1} parent=0 // loop_pre_header
    _
  $region3: #{pam_forward.1} parent=0 // loop_header
    %s12 = sphi 0, %s16
    %p13 = scmp.ge.s32.totalorder %s12, 4
    %s19 = sphi 0, %s31
    %s20 = sphi 0, %s27
    %s21 = sphi 0, %s19
    %s22 = sphi 0, %s20
    %s23 = sphi 0, %s21
    %s24 = sphi 0, %s22
    %s36 = sphi 0, %s38
    %s39 = sphi 0, %s36
    %s40 = sphi 0, %s39
    %s56 = sphi 0, %s40
    %s62 = sphi 0, %s64
    %s65 = sphi 0, %s62
    %s66 = sphi 0, %s65
    %s82 = sphi 0, %s66
    %s86 = sphi 0, %s86
    %s88 = sphi 0, %s86
    %s89 = sphi 0, %s88
    %s103 = sphi 0, %s89
    %s107 = sphi 0, %s107
    %s109 = sphi 0, %s107
    %s110 = sphi 0, %s109
    %s124 = sphi 0, %s110
    %s128 = sphi 0, %s128
    %s130 = sphi 0, %s128
    %s131 = sphi 0, %s130
    %s145 = sphi 0, %s131
    %s149 = sphi 0, %s149
    %s151 = sphi 0, %s149
    %s152 = sphi 0, %s151
    %s166 = sphi 0, %s152
    %s174 = sphi 0, %s176
    %s177 = sphi 0, %s174
    %s178 = sphi 0, %s177
    %s194 = sphi 0, %s178
  $region4: #{pam_forward.1} parent=0 // loop_header_branch
    %15 = sbr.rel (%p13) target = $region8
  $region5: #{pam_forward.1} parent=0 // loop_body
    %s17 = ssub.s32 %s12, 1
    %s18 = ssub.s32 %s12, 2
    %s25 = sadd.s32 1, %s20
    %p26 = scmp.ge.s32.totalorder %s25, 1
    %s27 = scalar_select %p26, 0, %s25
    %s28 = sadd.s32 1, %s19
    %s29 = scalar_select %p26, %s28, %s19
    %p30 = scmp.ge.s32.totalorder %s29, 2
    %s31 = scalar_select %p30, 0, %s29
    %s32 = ssub.s32 %s19, %s31
    %s33 = ssub.s32 %s20, %s27
    %s34 = sor.u32 %s32, %s33
    %p35 = scmp.eq.s32.totalorder %s34, 0
    %s37 = sadd.s32 %s36, 1
    %s38 = scalar_select %p35, %s36, %s37
    %p41 = pneg %p35
    %p42 = scmp.eq.s32.totalorder %s12, 1
    %p43 = por %p41, %p42
    %p44 = scmp.ne.s32.totalorder %s36, %s39
    %p45 = scmp.eq.s32.totalorder %s12, 0
    %p46 = por %p44, %p45
    %p47 = scmp.ne.s32.totalorder %s36, %s39
    %p48 = scmp.eq.s32.totalorder %s17, 1
    %p49 = por %p47, %p48
    %p50 = scmp.ne.s32.totalorder %s39, %s40
    %p51 = scmp.eq.s32.totalorder %s17, 0
    %p52 = por %p50, %p51
    %p53 = scmp.ne.s32.totalorder %s39, %s40
    %p54 = scmp.eq.s32.totalorder %s18, 1
    %p55 = por %p53, %p54
    %p57 = scmp.ne.s32.totalorder %s40, %s56
    %p58 = scmp.eq.s32.totalorder %s18, 0
    %p59 = por %p57, %p58
    %s60 = ssub.s32 %s19, %s31
    %p61 = scmp.eq.s32.totalorder %s60, 0
    %s63 = sadd.s32 %s62, 1
    %s64 = scalar_select %p61, %s62, %s63
    %p67 = pneg %p61
    %p68 = scmp.eq.s32.totalorder %s12, 1
    %p69 = por %p67, %p68
    %p70 = scmp.ne.s32.totalorder %s62, %s65
    %p71 = scmp.eq.s32.totalorder %s12, 0
    %p72 = por %p70, %p71
    %p73 = scmp.ne.s32.totalorder %s62, %s65
    %p74 = scmp.eq.s32.totalorder %s17, 1
    %p75 = por %p73, %p74
    %p76 = scmp.ne.s32.totalorder %s65, %s66
    %p77 = scmp.eq.s32.totalorder %s17, 0
    %p78 = por %p76, %p77
    %p79 = scmp.ne.s32.totalorder %s65, %s66
    %p80 = scmp.eq.s32.totalorder %s18, 1
    %p81 = por %p79, %p80
    %p83 = scmp.ne.s32.totalorder %s66, %s82
    %p84 = scmp.eq.s32.totalorder %s18, 0
    %p85 = por %p83, %p84
    %s87 = sadd.s32 %s86, 1
    %p90 = scmp.eq.s32.totalorder %s12, 1
    %p91 = scmp.ne.s32.totalorder %s86, %s88
    %p92 = scmp.eq.s32.totalorder %s12, 0
    %p93 = por %p91, %p92
    %p94 = scmp.ne.s32.totalorder %s86, %s88
    %p95 = scmp.eq.s32.totalorder %s17, 1
    %p96 = por %p94, %p95
    %p97 = scmp.ne.s32.totalorder %s88, %s89
    %p98 = scmp.eq.s32.totalorder %s17, 0
    %p99 = por %p97, %p98
    %p100 = scmp.ne.s32.totalorder %s88, %s89
    %p101 = scmp.eq.s32.totalorder %s18, 1
    %p102 = por %p100, %p101
    %p104 = scmp.ne.s32.totalorder %s89, %s103
    %p105 = scmp.eq.s32.totalorder %s18, 0
    %p106 = por %p104, %p105
    %s108 = sadd.s32 %s107, 1
    %p111 = scmp.eq.s32.totalorder %s12, 1
    %p112 = scmp.ne.s32.totalorder %s107, %s109
    %p113 = scmp.eq.s32.totalorder %s12, 0
    %p114 = por %p112, %p113
    %p115 = scmp.ne.s32.totalorder %s107, %s109
    %p116 = scmp.eq.s32.totalorder %s17, 1
    %p117 = por %p115, %p116
    %p118 = scmp.ne.s32.totalorder %s109, %s110
    %p119 = scmp.eq.s32.totalorder %s17, 0
    %p120 = por %p118, %p119
    %p121 = scmp.ne.s32.totalorder %s109, %s110
    %p122 = scmp.eq.s32.totalorder %s18, 1
    %p123 = por %p121, %p122
    %p125 = scmp.ne.s32.totalorder %s110, %s124
    %p126 = scmp.eq.s32.totalorder %s18, 0
    %p127 = por %p125, %p126
    %s129 = sadd.s32 %s128, 1
    %p132 = scmp.eq.s32.totalorder %s12, 1
    %p133 = scmp.ne.s32.totalorder %s128, %s130
    %p134 = scmp.eq.s32.totalorder %s12, 0
    %p135 = por %p133, %p134
    %p136 = scmp.ne.s32.totalorder %s128, %s130
    %p137 = scmp.eq.s32.totalorder %s17, 1
    %p138 = por %p136, %p137
    %p139 = scmp.ne.s32.totalorder %s130, %s131
    %p140 = scmp.eq.s32.totalorder %s17, 0
    %p141 = por %p139, %p140
    %p142 = scmp.ne.s32.totalorder %s130, %s131
    %p143 = scmp.eq.s32.totalorder %s18, 1
    %p144 = por %p142, %p143
    %p146 = scmp.ne.s32.totalorder %s131, %s145
    %p147 = scmp.eq.s32.totalorder %s18, 0
    %p148 = por %p146, %p147
    %s150 = sadd.s32 %s149, 1
    %p153 = scmp.eq.s32.totalorder %s12, 1
    %p154 = scmp.ne.s32.totalorder %s149, %s151
    %p155 = scmp.eq.s32.totalorder %s12, 0
    %p156 = por %p154, %p155
    %p157 = scmp.ne.s32.totalorder %s149, %s151
    %p158 = scmp.eq.s32.totalorder %s17, 1
    %p159 = por %p157, %p158
    %p160 = scmp.ne.s32.totalorder %s151, %s152
    %p161 = scmp.eq.s32.totalorder %s17, 0
    %p162 = por %p160, %p161
    %p163 = scmp.ne.s32.totalorder %s151, %s152
    %p164 = scmp.eq.s32.totalorder %s18, 1
    %p165 = por %p163, %p164
    %p167 = scmp.ne.s32.totalorder %s152, %s166
    %p168 = scmp.eq.s32.totalorder %s18, 0
    %p169 = por %p167, %p168
    %s170 = ssub.s32 %s19, %s31
    %s171 = ssub.s32 %s20, %s27
    %s172 = sor.u32 %s170, %s171
    %p173 = scmp.eq.s32.totalorder %s172, 0
    %s175 = sadd.s32 %s174, 1
    %s176 = scalar_select %p173, %s174, %s175
    %p179 = pneg %p173
    %p180 = scmp.eq.s32.totalorder %s12, 1
    %p181 = por %p179, %p180
    %p182 = scmp.ne.s32.totalorder %s174, %s177
    %p183 = scmp.eq.s32.totalorder %s12, 0
    %p184 = por %p182, %p183
    %p185 = scmp.ne.s32.totalorder %s174, %s177
    %p186 = scmp.eq.s32.totalorder %s17, 1
    %p187 = por %p185, %p186
    %p188 = scmp.ne.s32.totalorder %s177, %s178
    %p189 = scmp.eq.s32.totalorder %s17, 0
    %p190 = por %p188, %p189
    %p191 = scmp.ne.s32.totalorder %s177, %s178
    %p192 = scmp.eq.s32.totalorder %s18, 1
    %p193 = por %p191, %p192
    %p195 = scmp.ne.s32.totalorder %s178, %s194
    %p196 = scmp.eq.s32.totalorder %s18, 0
    %p197 = por %p195, %p196
    %p198 = scmp.le.s32.totalorder 1, %s12
    %p199 = scmp.lt.s32.totalorder %s12, 3
    %p200 = pnand %p198, %p199
    %p201 = pneg %p200
    // Predicated region
    $region9: #{pam_forward.1} parent=5 // pred_check
      _
    $region10: #{pam_forward.1} parent=5 // pred_check_branch
      %203 = sbr.rel (%p200) target = $region12
    $region11: #{pam_forward.1} parent=5 // pred_region
      %s204 = ssub.s32 %s12, 1
      // Predicated region
      $region13: #{pam_forward.1} parent=11 // pred_check
        %p205 = pneg %p99
      $region14: #{pam_forward.1} parent=11 // pred_check_branch
        %207 = sbr.rel (%p205) target = $region16
      $region15: #{pam_forward.1} parent=11 // pred_region
        _
      $region16: #{pam_forward.1} parent=11 // pred_fallthru
        _
      // Predicated region
      $region17: #{pam_forward.1} parent=11 // pred_check
        %p208 = pneg %p120
      $region18: #{pam_forward.1} parent=11 // pred_check_branch
        %210 = sbr.rel (%p208) target = $region20
      $region19: #{pam_forward.1} parent=11 // pred_region
        _
      $region20: #{pam_forward.1} parent=11 // pred_fallthru
        _
      // Predicated region
      $region21: #{pam_forward.1} parent=11 // pred_check
        %p211 = pneg %p141
      $region22: #{pam_forward.1} parent=11 // pred_check_branch
        %213 = sbr.rel (%p211) target = $region24
      $region23: #{pam_forward.1} parent=11 // pred_region
        _
      $region24: #{pam_forward.1} parent=11 // pred_fallthru
        _
      // Predicated region
      $region25: #{pam_forward.1} parent=11 // pred_check
        %p214 = pneg %p162
      $region26: #{pam_forward.1} parent=11 // pred_check_branch
        %216 = sbr.rel (%p214) target = $region28
      $region27: #{pam_forward.1} parent=11 // pred_region
        _
      $region28: #{pam_forward.1} parent=11 // pred_fallthru
        _
    $region12: #{pam_forward.1} parent=5 // pred_fallthru
      _
    %p217 = scmp.lt.s32.totalorder %s12, 2
    // Predicated region
    $region29: #{pam_forward.1} parent=5 // pred_check
      %p218 = pneg %p217
    $region30: #{pam_forward.1} parent=5 // pred_check_branch
      %220 = sbr.rel (%p218) target = $region32
    $region31: #{pam_forward.1} parent=5 // pred_region
      // Predicated region
      $region33: #{pam_forward.1} parent=31 // pred_check
        %p221 = pneg %p46
      $region34: #{pam_forward.1} parent=31 // pred_check_branch
        %223 = sbr.rel (%p221) target = $region36
      $region35: #{pam_forward.1} parent=31 // pred_region
        %s224 = smul.u32 2, %s20
        %p225 = scmp.lt.s32.totalorder %s19, 1
        %s226 = scalar_select %p225, %s19, 1
        %p227 = scmp.lt.s32.totalorder %s224, 1
        %s228 = scalar_select %p227, %s224, 1
        %s229 = smul.addr %s226, 2
        %s230 = sadd.s32 %s228, %s229
        %s231 = smul.addr %s230, 4
        %s232 = scalar_lea.vmem %s0, %s231
        %s233 = smul.u32 2, %s20
      $region36: #{pam_forward.1} parent=31 // pred_fallthru
        _
      // Predicated region
      $region37: #{pam_forward.1} parent=31 // pred_check
        %p234 = pneg %p72
      $region38: #{pam_forward.1} parent=31 // pred_check_branch
        %236 = sbr.rel (%p234) target = $region40
      $region39: #{pam_forward.1} parent=31 // pred_region
        %p237 = scmp.lt.s32.totalorder %s19, 1
        %s238 = scalar_select %p237, %s19, 1
        %s239 = smul.addr %s238, 4
        %s240 = scalar_lea.vmem %s1, %s239
      $region40: #{pam_forward.1} parent=31 // pred_fallthru
        _
    $region32: #{pam_forward.1} parent=5 // pred_fallthru
      _
    %p241 = scmp.le.s32.totalorder 1, %s12
    %p242 = scmp.lt.s32.totalorder %s12, 3
    %p243 = pnand %p241, %p242
    %p244 = pneg %p243
    // Predicated region
    $region41: #{pam_forward.1} parent=5 // pred_check
      _
    $region42: #{pam_forward.1} parent=5 // pred_check_branch
      %246 = sbr.rel (%p243) target = $region44
    $region43: #{pam_forward.1} parent=5 // pred_region
      %s247 = ssub.s32 %s12, 1
      %s248 = smul.u32 2, %s22
      %p249 = scmp.lt.s32.totalorder %s21, 1
      %s250 = scalar_select %p249, %s21, 1
      %p251 = scmp.lt.s32.totalorder %s248, 1
      %s252 = scalar_select %p251, %s248, 1
      %s253 = smul.addr %s250, 2
      %s254 = sadd.s32 %s252, %s253
      %s255 = smul.addr %s254, 4
      %s256 = scalar_lea.vmem %s0, %s255
      %p257 = pneg %p52
      %p258 = pneg %p49
      %p259 = scmp.lt.s32.totalorder %s21, 1
      %s260 = scalar_select %p259, %s21, 1
      %s261 = smul.addr %s260, 4
      %s262 = scalar_lea.vmem %s1, %s261
      %p263 = pneg %p78
      %p264 = pneg %p75
      %p265 = pneg %p99
      %p266 = pneg %p96
      %p267 = pneg %p120
      %p268 = pneg %p117
      %p269 = pneg %p141
      %p270 = pneg %p138
      %p271 = pneg %p162
      %p272 = pneg %p159
      %p273 = pneg %p190
      %p274 = pneg %p187
      %s275 = smul.u32 2, %s22
      %p276 = scmp.lt.s32.totalorder %s21, 1
      %s277 = scalar_select %p276, %s21, 1
      %p278 = scmp.lt.s32.totalorder %s275, 1
      %s279 = scalar_select %p278, %s275, 1
      %s280 = smul.addr %s277, 2
      %s281 = sadd.s32 %s279, %s280
      %s282 = smul.addr %s281, 4
      %s283 = scalar_lea.vmem %s6, %s282
      %s284 = smul.u32 2, %s22
      %p285 = scmp.lt.s32.totalorder %s21, 1
      %s286 = scalar_select %p285, %s21, 1
      %p287 = scmp.lt.s32.totalorder %s284, 1
      %s288 = scalar_select %p287, %s284, 1
      %s289 = smul.addr %s286, 2
      %s290 = sadd.s32 %s288, %s289
      %s291 = smul.addr %s290, 4
      %s292 = scalar_lea.vmem %s0, %s291
      %s293 = smul.u32 2, %s22
      %p294 = scmp.lt.s32.totalorder %s21, 1
      %s295 = scalar_select %p294, %s21, 1
      %s296 = smul.addr %s295, 4
      %s297 = scalar_lea.vmem %s1, %s296
      %s298 = smul.u32 2, %s22
      %p299 = scmp.lt.s32.totalorder %s21, 1
      %s300 = scalar_select %p299, %s21, 1
      %p301 = scmp.lt.s32.totalorder %s298, 1
      %s302 = scalar_select %p301, %s298, 1
      %s303 = smul.addr %s300, 2
      %s304 = sadd.s32 %s302, %s303
      %s305 = smul.addr %s304, 4
      %s306 = scalar_lea.vmem %s6, %s305
      %s307 = smul.u32 2, %s22
      %v309 = vld [vmem:[%s292] sm:$0xff]
      %v310 = vld [vmem:[%s297] sm:$0xf]
      %v311 = vld [vmem:[%s2] sm:$0xff]
      %v312 = vld [vmem:[%s2 + $0x8] sm:$0x1]
      %v313 = vld [vmem:[%s3] sm:$0xff]
      %v314 = vld [vmem:[%s3 + $0x8] sm:$0x1]
      %316 = vset.pattern.permute.xlu0 0
      %317 = vperm.xlu0 %316, %v313
      %v318 = vpop.permute.xlu0 %317
      %321 = vset.pattern.permute.xlu0 0
      %322 = vperm.xlu0 %321, %v314
      %v323 = vpop.permute.xlu0 %322
      %v326 = vcombine.high %v309, %v309
      %vm327 = vcmask 31744
      %v329 = vsel %vm327, %v311, 0
      %v332 = vsel %vm327, %v312, 0
      %vm334 = vcmask 1043456
      %v335 = vsel %vm334, %v309, 0
      %v337 = vsel %vm334, %v326, 0
      %339 = vmatprep.subr.mxu0 %v337
      %340 = vmatpush1.msra.mxu0 %v335
      %341 = vmatprep.subr.mxu0 0.0
      %342 = vmatpush1.msra.mxu0 0.0
      %343 = vmatprep.subr.mxu0 0.0
      %344 = vmatpush1.msra.mxu0 0.0
      %345 = vmatprep.subr.mxu0 0.0
      %346 = vmatpush1.msra.mxu0 0.0
      %347 = vmatprep.subr.mxu0 0.0
      %348 = vmatpush1.msra.mxu0 0.0
      %349 = vmatprep.subr.mxu0 0.0
      %350 = vmatpush1.msra.mxu0 0.0
      %351 = vmatprep.subr.mxu0 0.0
      %352 = vmatpush1.msra.mxu0 0.0
      %353 = vmatprep.subr.mxu0 0.0
      %354 = vmatpush1.msra.mxu0 0.0
      %355 = vmatprep.subr.mxu0 0.0
      %356 = vmatpush1.msra.mxu0 0.0
      %357 = vmatprep.subr.mxu0 0.0
      %358 = vmatpush1.msra.mxu0 0.0
      %359 = vmatprep.subr.mxu0 0.0
      %360 = vmatpush1.msra.mxu0 0.0
      %361 = vmatprep.subr.mxu0 0.0
      %362 = vmatpush1.msra.mxu0 0.0
      %363 = vmatprep.subr.mxu0 0.0
      %364 = vmatpush1.msra.mxu0 0.0
      %365 = vmatprep.subr.mxu0 0.0
      %366 = vmatpush1.msra.mxu0 0.0
      %367 = vmatprep.subr.mxu0 0.0
      %368 = vmatpush1.msra.mxu0 0.0
      %369 = vmatprep.subr.mxu0 0.0
      %370 = vmatpush1.msra.mxu0 0.0
      %371 = vmatprep.subr.mxu0 0.0
      %372 = vmatpush1.msra.mxu0 0.0
      %373 = vmatprep.subr.mxu0 0.0
      %374 = vmatpush1.msra.mxu0 0.0
      %375 = vmatprep.subr.mxu0 0.0
      %376 = vmatpush1.msra.mxu0 0.0
      %377 = vmatprep.subr.mxu0 0.0
      %378 = vmatpush1.msra.mxu0 0.0
      %379 = vmatprep.subr.mxu0 0.0
      %380 = vmatpush1.msra.mxu0 0.0
      %381 = vmatprep.subr.mxu0 0.0
      %382 = vmatpush1.msra.mxu0 0.0
      %383 = vmatprep.subr.mxu0 0.0
      %384 = vmatpush1.msra.mxu0 0.0
      %385 = vmatprep.subr.mxu0 0.0
      %386 = vmatpush1.msra.mxu0 0.0
      %387 = vmatprep.subr.mxu0 0.0
      %388 = vmatpush1.msra.mxu0 0.0
      %389 = vmatprep.subr.mxu0 0.0
      %390 = vmatpush1.msra.mxu0 0.0
      %391 = vmatprep.subr.mxu0 0.0
      %392 = vmatpush1.msra.mxu0 0.0
      %393 = vmatprep.subr.mxu0 0.0
      %394 = vmatpush1.msra.mxu0 0.0
      %395 = vmatprep.subr.mxu0 0.0
      %396 = vmatpush1.msra.mxu0 0.0
      %397 = vmatprep.subr.mxu0 0.0
      %398 = vmatpush1.msra.mxu0 0.0
      %399 = vmatprep.subr.mxu0 0.0
      %400 = vmatpush1.msra.mxu0 0.0
      %401 = vmatprep.subr.mxu0 0.0
      %402 = vmatpush1.msra.mxu0 0.0
      %403 = vmatprep.mubr.f32.mxu0 0.0
      %404 = vmatmul.mubr.f32.gmra.mrb[0].mxu0 %v329
      %v405 = vpop.f32.mrb[0].mxu0
      %v406 = vadd.f32 %v318, %v405
      %v407 = vpop.f32.mrb[0].mxu0
      %v408 = vadd.f32 %v318, %v407
      %409 = vmatprep.mubr.f32.mxu0 0.0
      %410 = vmatmul.mubr.f32.gmra.mrb[0].mxu0 %v332
      %v411 = vpop.f32.mrb[0].mxu0
      %v412 = vadd.f32 %v323, %v411
      %v413 = vpop.f32.mrb[0].mxu0
      %v414 = vadd.f32 %v323, %v413
      %415 = vdwg.mxu0
      %v416 = vxor.u32 %v412, 2147483648
      %v417 = vxor.u32 %v414, 2147483648
      %v418 = vmul.f32 %v416, 1.442695
      %v419 = vpow.pop %v418
      %v420 = vmul.f32 %v417, 1.442695
      %v421 = vpow.pop %v420
      %v422 = vadd.f32 %v419, 1.0
      %v423 = vadd.f32 %v421, 1.0
      %v424 = vrcp.pop %v422
      %v425 = vmul.f32 1.0, %v424
      %v426 = vrcp.pop %v423
      %v427 = vmul.f32 1.0, %v426
      %v428 = vld [vmem:[%s4] sm:$0xff]
      %v429 = vld [vmem:[%s5] sm:$0xff]
      %431 = vset.pattern.permute.xlu0 0
      %432 = vperm.xlu0 %431, %v429
      %v433 = vpop.permute.xlu0 %432
      %v436 = vsel %vm327, %v428, 0
      %v439 = vsel %vm334, %v310, 0
      %441 = vmatprep.subr.mxu0 0.0
      %442 = vmatpush1.msra.mxu0 %v439
      %443 = vmatprep.subr.mxu0 0.0
      %444 = vmatpush1.msra.mxu0 0.0
      %445 = vmatprep.subr.mxu0 0.0
      %446 = vmatpush1.msra.mxu0 0.0
      %447 = vmatprep.subr.mxu0 0.0
      %448 = vmatpush1.msra.mxu0 0.0
      %449 = vmatprep.subr.mxu0 0.0
      %450 = vmatpush1.msra.mxu0 0.0
      %451 = vmatprep.subr.mxu0 0.0
      %452 = vmatpush1.msra.mxu0 0.0
      %453 = vmatprep.subr.mxu0 0.0
      %454 = vmatpush1.msra.mxu0 0.0
      %455 = vmatprep.subr.mxu0 0.0
      %456 = vmatpush1.msra.mxu0 0.0
      %457 = vmatprep.subr.mxu0 0.0
      %458 = vmatpush1.msra.mxu0 0.0
      %459 = vmatprep.subr.mxu0 0.0
      %460 = vmatpush1.msra.mxu0 0.0
      %461 = vmatprep.subr.mxu0 0.0
      %462 = vmatpush1.msra.mxu0 0.0
      %463 = vmatprep.subr.mxu0 0.0
      %464 = vmatpush1.msra.mxu0 0.0
      %465 = vmatprep.subr.mxu0 0.0
      %466 = vmatpush1.msra.mxu0 0.0
      %467 = vmatprep.subr.mxu0 0.0
      %468 = vmatpush1.msra.mxu0 0.0
      %469 = vmatprep.subr.mxu0 0.0
      %470 = vmatpush1.msra.mxu0 0.0
      %471 = vmatprep.subr.mxu0 0.0
      %472 = vmatpush1.msra.mxu0 0.0
      %473 = vmatprep.subr.mxu0 0.0
      %474 = vmatpush1.msra.mxu0 0.0
      %475 = vmatprep.subr.mxu0 0.0
      %476 = vmatpush1.msra.mxu0 0.0
      %477 = vmatprep.subr.mxu0 0.0
      %478 = vmatpush1.msra.mxu0 0.0
      %479 = vmatprep.subr.mxu0 0.0
      %480 = vmatpush1.msra.mxu0 0.0
      %481 = vmatprep.subr.mxu0 0.0
      %482 = vmatpush1.msra.mxu0 0.0
      %483 = vmatprep.subr.mxu0 0.0
      %484 = vmatpush1.msra.mxu0 0.0
      %485 = vmatprep.subr.mxu0 0.0
      %486 = vmatpush1.msra.mxu0 0.0
      %487 = vmatprep.subr.mxu0 0.0
      %488 = vmatpush1.msra.mxu0 0.0
      %489 = vmatprep.subr.mxu0 0.0
      %490 = vmatpush1.msra.mxu0 0.0
      %491 = vmatprep.subr.mxu0 0.0
      %492 = vmatpush1.msra.mxu0 0.0
      %493 = vmatprep.subr.mxu0 0.0
      %494 = vmatpush1.msra.mxu0 0.0
      %495 = vmatprep.subr.mxu0 0.0
      %496 = vmatpush1.msra.mxu0 0.0
      %497 = vmatprep.subr.mxu0 0.0
      %498 = vmatpush1.msra.mxu0 0.0
      %499 = vmatprep.subr.mxu0 0.0
      %500 = vmatpush1.msra.mxu0 0.0
      %501 = vmatprep.subr.mxu0 0.0
      %502 = vmatpush1.msra.mxu0 0.0
      %503 = vmatprep.subr.mxu0 0.0
      %504 = vmatpush1.msra.mxu0 0.0
      %505 = vmatprep.mubr.f32.mxu0 0.0
      %506 = vmatmul.mubr.f32.gmra.mrb[0].mxu0 %v436
      %v507 = vpop.f32.mrb[0].mxu0
      %v508 = vadd.f32 %v433, %v507
      %v509 = vpop.f32.mrb[0].mxu0
      %510 = vdwg.mxu0
      %511 = vxpose.xlu0.b32.start [1/16] %v508, 128
      %512 = vxpose.xlu0.b32.cont [2/16] 0.0, 128
      %513 = vxpose.xlu0.b32.cont [3/16] 0.0, 128
      %514 = vxpose.xlu0.b32.cont [4/16] 0.0, 128
      %515 = vxpose.xlu0.b32.cont [5/16] 0.0, 128
      %516 = vxpose.xlu0.b32.cont [6/16] 0.0, 128
      %517 = vxpose.xlu0.b32.cont [7/16] 0.0, 128
      %518 = vxpose.xlu0.b32.cont [8/16] 0.0, 128
      %519 = vxpose.xlu0.b32.cont [9/16] 0.0, 128
      %520 = vxpose.xlu0.b32.cont [10/16] 0.0, 128
      %521 = vxpose.xlu0.b32.cont [11/16] 0.0, 128
      %522 = vxpose.xlu0.b32.cont [12/16] 0.0, 128
      %523 = vxpose.xlu0.b32.cont [13/16] 0.0, 128
      %524 = vxpose.xlu0.b32.cont [14/16] 0.0, 128
      %525 = vxpose.xlu0.b32.cont [15/16] 0.0, 128
      %526 = vxpose.xlu0.b32.end [16/16] 0.0, 128
      %v527 = vpop.trf.xlu0
      %v528 = vpop.trf.xlu0
      %v529 = vpop.trf.xlu0
      %v530 = vpop.trf.xlu0
      %v531 = vpop.trf.xlu0
      %v532 = vpop.trf.xlu0
      %v533 = vpop.trf.xlu0
      %v534 = vpop.trf.xlu0
      %v535 = vpop.trf.xlu0
      %v536 = vpop.trf.xlu0
      %v537 = vpop.trf.xlu0
      %v538 = vpop.trf.xlu0
      %v539 = vpop.trf.xlu0
      %v540 = vpop.trf.xlu0
      %v541 = vpop.trf.xlu0
      %v542 = vpop.trf.xlu0
      %v543 = vpack.c.bf16 %v528, %v527
      %v544 = vpack.c.bf16 %v530, %v529
      %v545 = vpack.c.bf16 %v532, %v531
      %v546 = vpack.c.bf16 %v534, %v533
      %v547 = vpack.c.bf16 %v536, %v535
      %v548 = vpack.c.bf16 %v538, %v537
      %v549 = vpack.c.bf16 %v540, %v539
      %v550 = vpack.c.bf16 %v542, %v541
      %v551 = vpack.c.bf16 %v406, %v406
      %v552 = vpack.c.bf16 %v408, %v408
      %vm553 = vcmask 64512
      %v555 = vsel %vm553, %v543, 0
      %v558 = vsel %vm553, %v544, 0
      %v561 = vsel %vm553, %v545, 0
      %v564 = vsel %vm553, %v546, 0
      %v567 = vsel %vm553, %v547, 0
      %v570 = vsel %vm553, %v548, 0
      %v573 = vsel %vm553, %v549, 0
      %v576 = vsel %vm553, %v550, 0
      %v579 = vsel %vm334, %v551, 0
      %v582 = vsel %vm334, %v552, 0
      %584 = vmatprep.subr.bf16.mxu0 %v582
      %585 = vmatpush1.bf16.msra.mxu0 %v579
      %586 = vmatprep.subr.bf16.mxu0 0
      %587 = vmatpush1.bf16.msra.mxu0 0
      %588 = vmatprep.subr.bf16.mxu0 0
      %589 = vmatpush1.bf16.msra.mxu0 0
      %590 = vmatprep.subr.bf16.mxu0 0
      %591 = vmatpush1.bf16.msra.mxu0 0
      %592 = vmatprep.subr.bf16.mxu0 0
      %593 = vmatpush1.bf16.msra.mxu0 0
      %594 = vmatprep.subr.bf16.mxu0 0
      %595 = vmatpush1.bf16.msra.mxu0 0
      %596 = vmatprep.subr.bf16.mxu0 0
      %597 = vmatpush1.bf16.msra.mxu0 0
      %598 = vmatprep.subr.bf16.mxu0 0
      %599 = vmatpush1.bf16.msra.mxu0 0
      %600 = vmatprep.subr.bf16.mxu0 0
      %601 = vmatpush1.bf16.msra.mxu0 0
      %602 = vmatprep.subr.bf16.mxu0 0
      %603 = vmatpush1.bf16.msra.mxu0 0
      %604 = vmatprep.subr.bf16.mxu0 0
      %605 = vmatpush1.bf16.msra.mxu0 0
      %606 = vmatprep.subr.bf16.mxu0 0
      %607 = vmatpush1.bf16.msra.mxu0 0
      %608 = vmatprep.subr.bf16.mxu0 0
      %609 = vmatpush1.bf16.msra.mxu0 0
      %610 = vmatprep.subr.bf16.mxu0 0
      %611 = vmatpush1.bf16.msra.mxu0 0
      %612 = vmatprep.subr.bf16.mxu0 0
      %613 = vmatpush1.bf16.msra.mxu0 0
      %614 = vmatprep.subr.bf16.mxu0 0
      %615 = vmatpush1.bf16.msra.mxu0 0
      %616 = vmatprep.mubr.bf16.mxu0 0
      %617 = vmatmul.mubr.bf16.gmra.mrb[0].mxu0 %v555
      %v618 = vpop.f32.mrb[0].mxu0
      %v619 = vadd.f32 0.0, %v618
      %v620 = vpop.f32.mrb[0].mxu0
      %v621 = vadd.f32 0.0, %v620
      %v622 = vpop.f32.mrb[0].mxu0
      %v623 = vadd.f32 0.0, %v622
      %v624 = vpop.f32.mrb[0].mxu0
      %v625 = vadd.f32 0.0, %v624
      %626 = vmatprep.mubr.bf16.mxu0 0
      %627 = vmatmul.mubr.bf16.gmra.mrb[0].mxu0 %v558
      %v628 = vpop.f32.mrb[0].mxu0
      %v629 = vadd.f32 0.0, %v628
      %v630 = vpop.f32.mrb[0].mxu0
      %v631 = vadd.f32 0.0, %v630
      %v632 = vpop.f32.mrb[0].mxu0
      %v633 = vadd.f32 0.0, %v632
      %v634 = vpop.f32.mrb[0].mxu0
      %v635 = vadd.f32 0.0, %v634
      %636 = vmatprep.mubr.bf16.mxu0 0
      %637 = vmatmul.mubr.bf16.gmra.mrb[0].mxu0 %v561
      %v638 = vpop.f32.mrb[0].mxu0
      %v639 = vadd.f32 0.0, %v638
      %v640 = vpop.f32.mrb[0].mxu0
      %v641 = vadd.f32 0.0, %v640
      %v642 = vpop.f32.mrb[0].mxu0
      %v643 = vadd.f32 0.0, %v642
      %v644 = vpop.f32.mrb[0].mxu0
      %v645 = vadd.f32 0.0, %v644
      %646 = vmatprep.mubr.bf16.mxu0 0
      %647 = vmatmul.mubr.bf16.gmra.mrb[0].mxu0 %v564
      %v648 = vpop.f32.mrb[0].mxu0
      %v649 = vadd.f32 0.0, %v648
      %v650 = vpop.f32.mrb[0].mxu0
      %v651 = vadd.f32 0.0, %v650
      %v652 = vpop.f32.mrb[0].mxu0
      %v653 = vadd.f32 0.0, %v652
      %v654 = vpop.f32.mrb[0].mxu0
      %v655 = vadd.f32 0.0, %v654
      %656 = vmatprep.mubr.bf16.mxu0 0
      %657 = vmatmul.mubr.bf16.gmra.mrb[0].mxu0 %v567
      %v658 = vpop.f32.mrb[0].mxu0
      %v659 = vadd.f32 0.0, %v658
      %v660 = vpop.f32.mrb[0].mxu0
      %v661 = vadd.f32 0.0, %v660
      %v662 = vpop.f32.mrb[0].mxu0
      %v663 = vadd.f32 0.0, %v662
      %v664 = vpop.f32.mrb[0].mxu0
      %v665 = vadd.f32 0.0, %v664
      %666 = vmatprep.mubr.bf16.mxu0 0
      %667 = vmatmul.mubr.bf16.gmra.mrb[0].mxu0 %v570
      %v668 = vpop.f32.mrb[0].mxu0
      %v669 = vadd.f32 0.0, %v668
      %v670 = vpop.f32.mrb[0].mxu0
      %v671 = vadd.f32 0.0, %v670
      %v672 = vpop.f32.mrb[0].mxu0
      %v673 = vadd.f32 0.0, %v672
      %v674 = vpop.f32.mrb[0].mxu0
      %v675 = vadd.f32 0.0, %v674
      %676 = vmatprep.mubr.bf16.mxu0 0
      %677 = vmatmul.mubr.bf16.gmra.mrb[0].mxu0 %v573
      %v678 = vpop.f32.mrb[0].mxu0
      %v679 = vadd.f32 0.0, %v678
      %v680 = vpop.f32.mrb[0].mxu0
      %v681 = vadd.f32 0.0, %v680
      %v682 = vpop.f32.mrb[0].mxu0
      %v683 = vadd.f32 0.0, %v682
      %v684 = vpop.f32.mrb[0].mxu0
      %v685 = vadd.f32 0.0, %v684
      %686 = vmatprep.mubr.bf16.mxu0 0
      %687 = vmatmul.mubr.bf16.gmra.mrb[0].mxu0 %v576
      %v688 = vpop.f32.mrb[0].mxu0
      %v689 = vadd.f32 0.0, %v688
      %v690 = vpop.f32.mrb[0].mxu0
      %v691 = vadd.f32 0.0, %v690
      %v692 = vpop.f32.mrb[0].mxu0
      %v693 = vadd.f32 0.0, %v692
      %v694 = vpop.f32.mrb[0].mxu0
      %v695 = vadd.f32 0.0, %v694
      %696 = vdwg.mxu0
      %v697 = vlaneseq
      %v698 = vshrl.u32 %v697, 7
      %v699 = vadd.s32 %v698, 8
      %v700 = vadd.s32 %v698, 16
      %v701 = vadd.s32 %v698, 24
      %v702 = vadd.s32 %v698, 32
      %v703 = vadd.s32 %v698, 40
      %v704 = vadd.s32 %v698, 48
      %v705 = vadd.s32 %v698, 56
      %v706 = vadd.s32 %v698, 64
      %v707 = vadd.s32 %v698, 72
      %v708 = vadd.s32 %v698, 80
      %v709 = vadd.s32 %v698, 88
      %v710 = vadd.s32 %v698, 96
      %v711 = vadd.s32 %v698, 104
      %v712 = vadd.s32 %v698, 112
      %v713 = vadd.s32 %v698, 120
      %vm714 = vcmp.lt.s32.totalorder %v698, 64
      %vm715 = vcmp.lt.s32.totalorder %v699, 64
      %vm716 = vcmp.lt.s32.totalorder %v700, 64
      %vm717 = vcmp.lt.s32.totalorder %v701, 64
      %vm718 = vcmp.lt.s32.totalorder %v702, 64
      %vm719 = vcmp.lt.s32.totalorder %v703, 64
      %vm720 = vcmp.lt.s32.totalorder %v704, 64
      %vm721 = vcmp.lt.s32.totalorder %v705, 64
      %vm722 = vcmp.lt.s32.totalorder %v706, 64
      %vm723 = vcmp.lt.s32.totalorder %v707, 64
      %vm724 = vcmp.lt.s32.totalorder %v708, 64
      %vm725 = vcmp.lt.s32.totalorder %v709, 64
      %vm726 = vcmp.lt.s32.totalorder %v710, 64
      %vm727 = vcmp.lt.s32.totalorder %v711, 64
      %vm728 = vcmp.lt.s32.totalorder %v712, 64
      %vm729 = vcmp.lt.s32.totalorder %v713, 64
      %v730 = vsel %vm714, %v619, -inf
      %v731 = vsel %vm714, %v621, -inf
      %v732 = vsel %vm715, %v623, -inf
      %v733 = vsel %vm715, %v625, -inf
      %v734 = vsel %vm716, %v629, -inf
      %v735 = vsel %vm716, %v631, -inf
      %v736 = vsel %vm717, %v633, -inf
      %v737 = vsel %vm717, %v635, -inf
      %v738 = vsel %vm718, %v639, -inf
      %v739 = vsel %vm718, %v641, -inf
      %v740 = vsel %vm719, %v643, -inf
      %v741 = vsel %vm719, %v645, -inf
      %v742 = vsel %vm720, %v649, -inf
      %v743 = vsel %vm720, %v651, -inf
      %v744 = vsel %vm721, %v653, -inf
      %v745 = vsel %vm721, %v655, -inf
      %v746 = vsel %vm722, %v659, -inf
      %v747 = vsel %vm722, %v661, -inf
      %v748 = vsel %vm723, %v663, -inf
      %v749 = vsel %vm723, %v665, -inf
      %v750 = vsel %vm724, %v669, -inf
      %v751 = vsel %vm724, %v671, -inf
      %v752 = vsel %vm725, %v673, -inf
      %v753 = vsel %vm725, %v675, -inf
      %v754 = vsel %vm726, %v679, -inf
      %v755 = vsel %vm726, %v681, -inf
      %v756 = vsel %vm727, %v683, -inf
      %v757 = vsel %vm727, %v685, -inf
      %v758 = vsel %vm728, %v689, -inf
      %v759 = vsel %vm728, %v691, -inf
      %v760 = vsel %vm729, %v693, -inf
      %v761 = vsel %vm729, %v695, -inf
      %v762 = vmax.f32 %v730, %v734
      %v763 = vmax.f32 %v732, %v736
      %v764 = vmax.f32 %v762, %v738
      %v765 = vmax.f32 %v763, %v740
      %v766 = vmax.f32 %v764, %v742
      %v767 = vmax.f32 %v765, %v744
      %v768 = vmax.f32 %v766, %v746
      %v769 = vmax.f32 %v767, %v748
      %v770 = vmax.f32 %v768, %v750
      %v771 = vmax.f32 %v769, %v752
      %v772 = vmax.f32 %v770, %v754
      %v773 = vmax.f32 %v771, %v756
      %v774 = vmax.f32 %v772, %v758
      %v775 = vmax.f32 %v773, %v760
      %v776 = vmax.f32 %v774, %v775
      %v777 = vrot.slane %v776, 4
      %v778 = vmax.f32 %v776, %v777
      %v779 = vrot.slane %v778, 2
      %v780 = vmax.f32 %v778, %v779
      %v781 = vrot.slane %v780, 1
      %v782 = vmax.f32 %v780, %v781
      %v783 = vmax.f32 %v731, %v735
      %v784 = vmax.f32 %v733, %v737
      %v785 = vmax.f32 %v783, %v739
      %v786 = vmax.f32 %v784, %v741
      %v787 = vmax.f32 %v785, %v743
      %v788 = vmax.f32 %v786, %v745
      %v789 = vmax.f32 %v787, %v747
      %v790 = vmax.f32 %v788, %v749
      %v791 = vmax.f32 %v789, %v751
      %v792 = vmax.f32 %v790, %v753
      %v793 = vmax.f32 %v791, %v755
      %v794 = vmax.f32 %v792, %v757
      %v795 = vmax.f32 %v793, %v759
      %v796 = vmax.f32 %v794, %v761
      %v797 = vmax.f32 %v795, %v796
      %v798 = vrot.slane %v797, 4
      %v799 = vmax.f32 %v797, %v798
      %v800 = vrot.slane %v799, 2
      %v801 = vmax.f32 %v799, %v800
      %v802 = vrot.slane %v801, 1
      %v803 = vmax.f32 %v801, %v802
      %v804 = vsub.f32 %v730, %v782
      %v805 = vsub.f32 %v731, %v803
      %v806 = vsub.f32 %v732, %v782
      %v807 = vsub.f32 %v733, %v803
      %v808 = vsub.f32 %v734, %v782
      %v809 = vsub.f32 %v735, %v803
      %v810 = vsub.f32 %v736, %v782
      %v811 = vsub.f32 %v737, %v803
      %v812 = vsub.f32 %v738, %v782
      %v813 = vsub.f32 %v739, %v803
      %v814 = vsub.f32 %v740, %v782
      %v815 = vsub.f32 %v741, %v803
      %v816 = vsub.f32 %v742, %v782
      %v817 = vsub.f32 %v743, %v803
      %v818 = vsub.f32 %v744, %v782
      %v819 = vsub.f32 %v745, %v803
      %v820 = vsub.f32 %v746, %v782
      %v821 = vsub.f32 %v747, %v803
      %v822 = vsub.f32 %v748, %v782
      %v823 = vsub.f32 %v749, %v803
      %v824 = vsub.f32 %v750, %v782
      %v825 = vsub.f32 %v751, %v803
      %v826 = vsub.f32 %v752, %v782
      %v827 = vsub.f32 %v753, %v803
      %v828 = vsub.f32 %v754, %v782
      %v829 = vsub.f32 %v755, %v803
      %v830 = vsub.f32 %v756, %v782
      %v831 = vsub.f32 %v757, %v803
      %v832 = vsub.f32 %v758, %v782
      %v833 = vsub.f32 %v759, %v803
      %v834 = vsub.f32 %v760, %v782
      %v835 = vsub.f32 %v761, %v803
      %v836 = vmul.f32 %v804, 1.442695
      %v837 = vpow.pop %v836
      %v838 = vmul.f32 %v805, 1.442695
      %v839 = vpow.pop %v838
      %v840 = vmul.f32 %v806, 1.442695
      %v841 = vpow.pop %v840
      %v842 = vmul.f32 %v807, 1.442695
      %v843 = vpow.pop %v842
      %v844 = vmul.f32 %v808, 1.442695
      %v845 = vpow.pop %v844
      %v846 = vmul.f32 %v809, 1.442695
      %v847 = vpow.pop %v846
      %v848 = vmul.f32 %v810, 1.442695
      %v849 = vpow.pop %v848
      %v850 = vmul.f32 %v811, 1.442695
      %v851 = vpow.pop %v850
      %v852 = vmul.f32 %v812, 1.442695
      %v853 = vpow.pop %v852
      %v854 = vmul.f32 %v813, 1.442695
      %v855 = vpow.pop %v854
      %v856 = vmul.f32 %v814, 1.442695
      %v857 = vpow.pop %v856
      %v858 = vmul.f32 %v815, 1.442695
      %v859 = vpow.pop %v858
      %v860 = vmul.f32 %v816, 1.442695
      %v861 = vpow.pop %v860
      %v862 = vmul.f32 %v817, 1.442695
      %v863 = vpow.pop %v862
      %v864 = vmul.f32 %v818, 1.442695
      %v865 = vpow.pop %v864
      %v866 = vmul.f32 %v819, 1.442695
      %v867 = vpow.pop %v866
      %v868 = vmul.f32 %v820, 1.442695
      %v869 = vpow.pop %v868
      %v870 = vmul.f32 %v821, 1.442695
      %v871 = vpow.pop %v870
      %v872 = vmul.f32 %v822, 1.442695
      %v873 = vpow.pop %v872
      %v874 = vmul.f32 %v823, 1.442695
      %v875 = vpow.pop %v874
      %v876 = vmul.f32 %v824, 1.442695
      %v877 = vpow.pop %v876
      %v878 = vmul.f32 %v825, 1.442695
      %v879 = vpow.pop %v878
      %v880 = vmul.f32 %v826, 1.442695
      %v881 = vpow.pop %v880
      %v882 = vmul.f32 %v827, 1.442695
      %v883 = vpow.pop %v882
      %v884 = vmul.f32 %v828, 1.442695
      %v885 = vpow.pop %v884
      %v886 = vmul.f32 %v829, 1.442695
      %v887 = vpow.pop %v886
      %v888 = vmul.f32 %v830, 1.442695
      %v889 = vpow.pop %v888
      %v890 = vmul.f32 %v831, 1.442695
      %v891 = vpow.pop %v890
      %v892 = vmul.f32 %v832, 1.442695
      %v893 = vpow.pop %v892
      %v894 = vmul.f32 %v833, 1.442695
      %v895 = vpow.pop %v894
      %v896 = vmul.f32 %v834, 1.442695
      %v897 = vpow.pop %v896
      %v898 = vmul.f32 %v835, 1.442695
      %v899 = vpow.pop %v898
      %v900 = vadd.f32 %v837, %v841
      %v901 = vadd.f32 %v900, %v845
      %v902 = vadd.f32 %v901, %v849
      %v903 = vadd.f32 %v902, %v853
      %v904 = vadd.f32 %v903, %v857
      %v905 = vadd.f32 %v904, %v861
      %v906 = vadd.f32 %v905, %v865
      %v907 = vadd.f32 %v906, %v869
      %v908 = vadd.f32 %v907, %v873
      %v909 = vadd.f32 %v908, %v877
      %v910 = vadd.f32 %v909, %v881
      %v911 = vadd.f32 %v910, %v885
      %v912 = vadd.f32 %v911, %v889
      %v913 = vadd.f32 %v912, %v893
      %v914 = vadd.f32 %v913, %v897
      %v915 = vrot.slane %v914, 4
      %v916 = vadd.f32 %v914, %v915
      %v917 = vrot.slane %v916, 2
      %v918 = vadd.f32 %v916, %v917
      %v919 = vrot.slane %v918, 1
      %v920 = vadd.f32 %v918, %v919
      %v921 = vadd.f32 %v839, %v843
      %v922 = vadd.f32 %v921, %v847
      %v923 = vadd.f32 %v922, %v851
      %v924 = vadd.f32 %v923, %v855
      %v925 = vadd.f32 %v924, %v859
      %v926 = vadd.f32 %v925, %v863
      %v927 = vadd.f32 %v926, %v867
      %v928 = vadd.f32 %v927, %v871
      %v929 = vadd.f32 %v928, %v875
      %v930 = vadd.f32 %v929, %v879
      %v931 = vadd.f32 %v930, %v883
      %v932 = vadd.f32 %v931, %v887
      %v933 = vadd.f32 %v932, %v891
      %v934 = vadd.f32 %v933, %v895
      %v935 = vadd.f32 %v934, %v899
      %v936 = vrot.slane %v935, 4
      %v937 = vadd.f32 %v935, %v936
      %v938 = vrot.slane %v937, 2
      %v939 = vadd.f32 %v937, %v938
      %v940 = vrot.slane %v939, 1
      %v941 = vadd.f32 %v939, %v940
      %v942 = vrcp.pop %v920
      %v943 = vrcp.pop %v941
      %v944 = vmul.f32 %v837, %v942
      %v945 = vmul.f32 %v839, %v943
      %v946 = vmul.f32 %v841, %v942
      %v947 = vmul.f32 %v843, %v943
      %v948 = vmul.f32 %v845, %v942
      %v949 = vmul.f32 %v847, %v943
      %v950 = vmul.f32 %v849, %v942
      %v951 = vmul.f32 %v851, %v943
      %v952 = vmul.f32 %v853, %v942
      %v953 = vmul.f32 %v855, %v943
      %v954 = vmul.f32 %v857, %v942
      %v955 = vmul.f32 %v859, %v943
      %v956 = vmul.f32 %v861, %v942
      %v957 = vmul.f32 %v863, %v943
      %v958 = vmul.f32 %v865, %v942
      %v959 = vmul.f32 %v867, %v943
      %v960 = vmul.f32 %v869, %v942
      %v961 = vmul.f32 %v871, %v943
      %v962 = vmul.f32 %v873, %v942
      %v963 = vmul.f32 %v875, %v943
      %v964 = vmul.f32 %v877, %v942
      %v965 = vmul.f32 %v879, %v943
      %v966 = vmul.f32 %v881, %v942
      %v967 = vmul.f32 %v883, %v943
      %v968 = vmul.f32 %v885, %v942
      %v969 = vmul.f32 %v887, %v943
      %v970 = vmul.f32 %v889, %v942
      %v971 = vmul.f32 %v891, %v943
      %v972 = vmul.f32 %v893, %v942
      %v973 = vmul.f32 %v895, %v943
      %v974 = vmul.f32 %v897, %v942
      %v975 = vmul.f32 %v899, %v943
      %v976 = vpack.c.bf16 %v310, %v310
      %v977 = vpack.c.bf16 %v946, %v944
      %v978 = vpack.c.bf16 %v947, %v945
      %v979 = vpack.c.bf16 %v950, %v948
      %v980 = vpack.c.bf16 %v951, %v949
      %v981 = vpack.c.bf16 %v954, %v952
      %v982 = vpack.c.bf16 %v955, %v953
      %v983 = vpack.c.bf16 %v958, %v956
      %v984 = vpack.c.bf16 %v959, %v957
      %v985 = vpack.c.bf16 %v962, %v960
      %v986 = vpack.c.bf16 %v963, %v961
      %v987 = vpack.c.bf16 %v966, %v964
      %v988 = vpack.c.bf16 %v967, %v965
      %v989 = vpack.c.bf16 %v970, %v968
      %v990 = vpack.c.bf16 %v971, %v969
      %v991 = vpack.c.bf16 %v974, %v972
      %v992 = vpack.c.bf16 %v975, %v973
      %993 = vmatprep.subr.bf16.mxu0 %v978
      %994 = vmatpush1.bf16.msra.mxu0 %v977
      %995 = vmatprep.subr.bf16.mxu0 %v980
      %996 = vmatpush1.bf16.msra.mxu0 %v979
      %997 = vmatprep.subr.bf16.mxu0 %v982
      %998 = vmatpush1.bf16.msra.mxu0 %v981
      %999 = vmatprep.subr.bf16.mxu0 %v984
      %1000 = vmatpush1.bf16.msra.mxu0 %v983
      %1001 = vmatprep.subr.bf16.mxu0 %v986
      %1002 = vmatpush1.bf16.msra.mxu0 %v985
      %1003 = vmatprep.subr.bf16.mxu0 %v988
      %1004 = vmatpush1.bf16.msra.mxu0 %v987
      %1005 = vmatprep.subr.bf16.mxu0 %v990
      %1006 = vmatpush1.bf16.msra.mxu0 %v989
      %1007 = vmatprep.subr.bf16.mxu0 %v992
      %1008 = vmatpush1.bf16.msra.mxu0 %v991
      %1009 = vmatprep.subr.bf16.mxu0 0
      %1010 = vmatpush1.bf16.msra.mxu0 0
      %1011 = vmatprep.subr.bf16.mxu0 0
      %1012 = vmatpush1.bf16.msra.mxu0 0
      %1013 = vmatprep.subr.bf16.mxu0 0
      %1014 = vmatpush1.bf16.msra.mxu0 0
      %1015 = vmatprep.subr.bf16.mxu0 0
      %1016 = vmatpush1.bf16.msra.mxu0 0
      %1017 = vmatprep.subr.bf16.mxu0 0
      %1018 = vmatpush1.bf16.msra.mxu0 0
      %1019 = vmatprep.subr.bf16.mxu0 0
      %1020 = vmatpush1.bf16.msra.mxu0 0
      %1021 = vmatprep.subr.bf16.mxu0 0
      %1022 = vmatpush1.bf16.msra.mxu0 0
      %1023 = vmatprep.subr.bf16.mxu0 0
      %1024 = vmatpush1.bf16.msra.mxu0 0
      %1025 = vmatprep.mubr.bf16.mxu0 0
      %1026 = vmatmul.mubr.bf16.gmra.mrb[0].mxu0 %v976
      %v1027 = vpop.f32.mrb[0].mxu0
      %v1028 = vadd.f32 0.0, %v1027
      %v1029 = vpop.f32.mrb[0].mxu0
      %v1030 = vadd.f32 0.0, %v1029
      %v1031 = vpop.f32.mrb[0].mxu0
      %v1032 = vpop.f32.mrb[0].mxu0
      %1033 = vdwg.mxu0
      %v1034 = vsub.f32 1.0, %v425
      %v1035 = vsub.f32 1.0, %v427
      %v1036 = vlaneseq
      %v1037 = vshrl.u32 %v1036, 7
      %v1038 = vsub.s32 0, %v1037
      %v1039 = vrot.slane %v1034, %v1038
      %v1040 = vlaneseq
      %v1041 = vshrl.u32 %v1040, 7
      %v1042 = vsub.s32 0, %v1041
      %v1043 = vrot.slane %v1035, %v1042
      %v1044 = vmul.f32 %v1039, %v1028
      %v1045 = vmul.f32 %v1043, %v1030
      %v1046 = vlaneseq
      %v1047 = vshrl.u32 %v1046, 7
      %v1048 = vsub.s32 0, %v1047
      %v1049 = vrot.slane %v425, %v1048
      %v1050 = vlaneseq
      %v1051 = vshrl.u32 %v1050, 7
      %v1052 = vsub.s32 0, %v1051
      %v1053 = vrot.slane %v427, %v1052
      %v1055 = vmul.f32 %v1049, %v309
      %v1056 = vmul.f32 %v1053, %v326
      %v1057 = vadd.f32 %v1044, %v1055
      %v1058 = vadd.f32 %v1045, %v1056
      %v1061 = vcombine.low %v1057, %v1058
      %1063 = vst [vmem:[%s306] sm:$0xff] %v1061
      %s1064 = smul.u32 2, %s22
      %p1065 = scmp.lt.s32.totalorder %s21, 1
      %s1066 = scalar_select %p1065, %s21, 1
      %p1067 = scmp.lt.s32.totalorder %s1064, 1
      %s1068 = scalar_select %p1067, %s1064, 1
      %s1069 = smul.addr %s1066, 2
      %s1070 = sadd.s32 %s1068, %s1069
      %s1071 = smul.addr %s1070, 4
      %s1072 = scalar_lea.vmem %s6, %s1071
      // Predicated region
      $region45: #{pam_forward.1} parent=43 // pred_check
        %p1073 = pneg %p187
      $region46: #{pam_forward.1} parent=43 // pred_check_branch
        %1075 = sbr.rel (%p1073) target = $region48
      $region47: #{pam_forward.1} parent=43 // pred_region
        %s1076 = smul.u32 2, %s22
      $region48: #{pam_forward.1} parent=43 // pred_fallthru
        _
    $region44: #{pam_forward.1} parent=5 // pred_fallthru
      _
    %p1077 = scmp.le.s32.totalorder 2, %s12
    // Predicated region
    $region49: #{pam_forward.1} parent=5 // pred_check
      %p1078 = pneg %p1077
    $region50: #{pam_forward.1} parent=5 // pred_check_branch
      %1080 = sbr.rel (%p1078) target = $region52
    $region51: #{pam_forward.1} parent=5 // pred_region
      %s1081 = ssub.s32 %s12, 2
      // Predicated region
      $region53: #{pam_forward.1} parent=51 // pred_check
        %p1082 = pneg %p193
      $region54: #{pam_forward.1} parent=51 // pred_check_branch
        %1084 = sbr.rel (%p1082) target = $region56
      $region55: #{pam_forward.1} parent=51 // pred_region
        %s1085 = smul.u32 2, %s24
        %p1086 = scmp.lt.s32.totalorder %s23, 1
        %s1087 = scalar_select %p1086, %s23, 1
        %p1088 = scmp.lt.s32.totalorder %s1085, 1
        %s1089 = scalar_select %p1088, %s1085, 1
        %s1090 = smul.addr %s1087, 2
        %s1091 = sadd.s32 %s1089, %s1090
        %s1092 = smul.addr %s1091, 4
        %s1093 = scalar_lea.vmem %s6, %s1092
      $region56: #{pam_forward.1} parent=51 // pred_fallthru
        _
    $region52: #{pam_forward.1} parent=5 // pred_fallthru
      _
  $region6: #{pam_forward.1} parent=0 // loop_footer
    %s16 = sadd.s32 1, %s12
  $region7: #{pam_forward.1} parent=0 // loop_footer_branch
    %11 = sbr.rel target = $region3
  $region8: #{pam_forward.1} parent=0 // loop_exit
    _

</llo_original>
